<compile_context>
chip_gen: v7x
topology: tpu7x:2x2x1
jax: 0.10.0
libtpu: 0.0.40
codegen_flags: <defaults>
</compile_context>

<pallas_src>
import math

import jax
import jax.numpy as jnp
from jax.experimental import pallas as pl
from jax.experimental.pallas import tpu as pltpu

_EPS = 1e-12          # F.normalize default eps (applied to the L2 norm)
_EPS_SQ = _EPS * _EPS


def _arcsin01(z):
    """arcsin(z) for z in [0, 1] via Abramowitz & Stegun 4.4.46 (|err|<=2e-8).

    arcsin(z) = pi/2 - sqrt(1 - z) * (a0 + a1 z + ... + a7 z^7)
    VPU-only (mul/add/sqrt), so it lowers cleanly in Mosaic.
    """
    p = -0.0012624911
    p = p * z + 0.0066700901
    p = p * z + -0.0170881256
    p = p * z + 0.0308918810
    p = p * z + -0.0501743046
    p = p * z + 0.0889789874
    p = p * z + -0.2145988016
    p = p * z + 1.5707963050
    return (math.pi / 2) - jnp.sqrt(jnp.maximum(1.0 - z, 0.0)) * p


def _prompt_kernel(x_ref, e_ref, inv_e_ref, out_ref):
    """Per-tile fused spherical-distance partial sums.

    x_ref:     [TN, D] input-embedding tile (native dtype; bf16 goes straight
               to the MXU)
    e_ref:     [M,  D] prompt embeddings, resident (constant index_map)
    inv_e_ref: [M,  1] precomputed 1/max(||e||, eps), resident
    out_ref:   [1, TN] f32, per-column sum over the M prompt rows of
               2*arcsin(||a-b||/2)^2  (lane-dense in N)
    """
    x = x_ref[...]                                   # [TN, D]
    e = e_ref[...]                                   # [M,  D]

    # Cosine-similarity numerator on the MXU; [M, TN] keeps N on the lane axis.
    sim_raw = jax.lax.dot_general(
        e, x, (((1,), (1,)), ((), ())), preferred_element_type=jnp.float32)

    # Per-x-row squared norms, produced directly as a lane-major [1, TN] row by
    # contracting the squared tile with a ones row on the MXU.
    x32 = x.astype(jnp.float32)
    ones_row = jnp.ones((1, x32.shape[-1]), jnp.float32)
    xsq_row = jax.lax.dot_general(
        ones_row, x32 * x32, (((1,), (1,)), ((), ())),
        preferred_element_type=jnp.float32)          # [1, TN]
    inv_x = jax.lax.rsqrt(jnp.maximum(xsq_row, _EPS_SQ))   # == 1/max(||x||,eps)

    # Norm scaling factors out of the bilinear form -> apply to [M, TN] result.
    sim = sim_raw * inv_e_ref[...] * inv_x           # [M,TN]*[M,1]*[1,TN]

    # ||a-b||/2 = sqrt((1 - a.b)/2) for unit vectors; clamp for FP rounding
    # (PyTorch would produce NaN past 1.0 -- clamp is a deliberate deviation).
    z = jnp.sqrt(jnp.clip((1.0 - sim) * 0.5, 0.0, 1.0))
    a = _arcsin01(z)
    dists = 2.0 * a * a                              # [M, TN]

    # Fused reduction over the (tiny) M axis; Pallas clips the writeback of any
    # padded tail columns in the last block, so garbage never reaches HBM.
    out_ref[...] = jnp.sum(dists, axis=0, keepdims=True)    # [1, TN]


def _choose_tile_n(N, D, tile_n):
    """N-tile: big enough to amortize grid-step overhead, VMEM-safe, 128-aligned."""
    # Keep the double-buffered x tile under ~24 MiB (headroom inside the 32 MiB
    # scoped-VMEM default; v7x has only 64 MiB physical VMEM).
    vmem_cap_rows = max(128, ((24 * 1024 * 1024) // (2 * D * 4)) // 128 * 128)
    tile_n = min(tile_n, vmem_cap_rows)
    if N <= tile_n:
        # Prefer two grid steps (v7x megacore sharding) when N is large enough
        # to split into two 128-aligned tiles of >=512 rows each.
        if N >= 1024 and N % 256 == 0:
            return N // 2
        return N
    return max(128, (tile_n // 128) * 128)


def _prompt_partial_sums(x, embed, inv_e, *, tile_n=1024):
    """Pallas call: x [N,D], embed [M,D], inv_e [M,1] -> per-column sums [1,N]."""
    N, D = x.shape
    M, De = embed.shape
    assert D == De, "embed dim mismatch"

    tn = _choose_tile_n(N, D, tile_n)
    grid = (pl.cdiv(N, tn),)

    return pl.pallas_call(
        _prompt_kernel,
        out_shape=jax.ShapeDtypeStruct((1, N), jnp.float32),
        grid=grid,
        in_specs=[
            pl.BlockSpec((tn, D), lambda i: (i, 0)),   # x: tiled over N
            pl.BlockSpec((M, D), lambda i: (0, 0)),    # embed: resident
            pl.BlockSpec((M, 1), lambda i: (0, 0)),    # 1/||embed||: resident
        ],
        out_specs=pl.BlockSpec((1, tn), lambda i: (0, i)),  # lane-dense in N
        compiler_params=pltpu.CompilerParams(
            dimension_semantics=("parallel",)),        # shard N tiles across TCs
    )(x, embed, inv_e)


def prompt_forward(x, embed, weight, stop, *, tile_n=1024):
    """Full `Prompt.forward` (forward semantics; ReplaceGrad is identity fwd)."""
    del stop  # `stop` only affects the backward pass via ReplaceGrad
    N, _ = x.shape
    M, _ = embed.shape

    # Hoisted, one-time embed inverse norms (tiny [M,1]); F.normalize semantics.
    e32 = embed.astype(jnp.float32)
    inv_e = 1.0 / jnp.maximum(
        jnp.sqrt(jnp.sum(e32 * e32, axis=-1, keepdims=True)), _EPS)

    col_sums = _prompt_partial_sums(x, embed, inv_e, tile_n=tile_n)  # [1, N]
    mean = jnp.sum(col_sums) / (N * M)

    # NOTE: assumes a scalar `weight` (the module's buffer default); a
    # per-prompt weight would need to be applied before the mean.
    weight = jnp.asarray(weight, jnp.float32)
    return jnp.abs(weight) * (jnp.sign(weight) * mean)


def _reference(x, embed, weight):
    """Plain-JAX reference mirroring the PyTorch forward."""
    x_n = x / jnp.maximum(jnp.linalg.norm(x, axis=-1, keepdims=True), _EPS)
    e_n = embed / jnp.maximum(jnp.linalg.norm(embed, axis=-1, keepdims=True), _EPS)
    d = jnp.linalg.norm(x_n[:, None, :] - e_n[None, :, :], axis=-1)
    dists = jnp.square(jnp.arcsin(jnp.clip(d / 2.0, 0.0, 1.0))) * 2.0
    dists = dists * jnp.sign(weight)
    return jnp.abs(weight) * jnp.mean(dists)


if __name__ == "__main__":
    key = jax.random.PRNGKey(0)
    kx, ke = jax.random.split(key)

    # Small CLIP-Prompt-like shapes: N cutout embeddings, M prompt embeddings.
    N, M, D = 256, 2, 512
    x = jax.random.normal(kx, (N, D), dtype=jnp.float32)
    embed = jax.random.normal(ke, (M, D), dtype=jnp.float32)
    weight = jnp.asarray(1.0, dtype=jnp.float32)       # Prompt buffer `weight`
    stop = jnp.asarray(-jnp.inf, dtype=jnp.float32)    # Prompt buffer `stop`

    fwd = jax.jit(prompt_forward)

    out = jax.block_until_ready(fwd(x, embed, weight, stop))
    ref = jax.block_until_ready(_reference(x, embed, weight))
    assert jnp.allclose(out, ref, atol=2e-5, rtol=2e-5), (out, ref)

    # Also exercise the multi-tile path (grid of 3, ragged last block).
    x2 = jax.random.normal(jax.random.PRNGKey(1), (2304, D), dtype=jnp.float32)
    out2 = jax.block_until_ready(fwd(x2, embed, weight, stop))
    ref2 = jax.block_until_ready(_reference(x2, embed, weight))
    assert jnp.allclose(out2, ref2, atol=2e-5, rtol=2e-5), (out2, ref2)

    print("KERNEL_OK")
</pallas_src>

<mosaic_0001>
module attributes {stable_mosaic.version = 11 : i64} {
  func.func @_prompt_kernel(%arg0: i32, %arg1: memref<256x512xf32, #tpu.memory_space<vmem>>, %arg2: memref<2x512xf32, #tpu.memory_space<vmem>>, %arg3: memref<2x1xf32, #tpu.memory_space<vmem>>, %arg4: memref<1x256xf32, #tpu.memory_space<vmem>>) attributes {dimension_semantics = [#tpu.dimension_semantics<parallel>], iteration_bounds = array<i64: 1>, scalar_prefetch = 0 : i64, scratch_operands = 0 : i64, tpu.core_type = #tpu.core_type<tc>, window_params = [{transform_indices = @transform_0, window_bounds = array<i64: 256, 512>}, {pipeline_mode = #tpu.pipeline_mode<synchronous>, transform_indices = @transform_1, window_bounds = array<i64: 2, 512>}, {pipeline_mode = #tpu.pipeline_mode<synchronous>, transform_indices = @transform_2, window_bounds = array<i64: 2, 1>}, {transform_indices = @transform_3, window_bounds = array<i64: 1, 256>}]} {
    %c0 = arith.constant 0 : index
    %c0_0 = arith.constant 0 : index
    %0 = vector.load %arg1[%c0, %c0_0] : memref<256x512xf32, #tpu.memory_space<vmem>>, vector<256x512xf32>
    %c0_1 = arith.constant 0 : index
    %c0_2 = arith.constant 0 : index
    %1 = vector.load %arg2[%c0_1, %c0_2] : memref<2x512xf32, #tpu.memory_space<vmem>>, vector<2x512xf32>
    %cst = arith.constant dense<0.000000e+00> : vector<2x256xf32>
    %2 = tpu.matmul %1, %0, %cst {dimension_numbers = #tpu.dot_dimension_numbers<[1], [1], [0], [0], [0, 0, 1, 0], [], []>} : vector<2x512xf32>, vector<256x512xf32>, vector<2x256xf32> -> vector<2x256xf32>
    %cst_3 = arith.constant 1.000000e+00 : f32
    %3 = vector.broadcast %cst_3 : f32 to vector<1x512xf32>
    %4 = arith.mulf %0, %0 : vector<256x512xf32>
    %cst_4 = arith.constant dense<0.000000e+00> : vector<1x256xf32>
    %5 = tpu.matmul %3, %4, %cst_4 {dimension_numbers = #tpu.dot_dimension_numbers<[1], [1], [0], [0], [0, 0, 1, 0], [], []>} : vector<1x512xf32>, vector<256x512xf32>, vector<1x256xf32> -> vector<1x256xf32>
    %cst_5 = arith.constant 1.000000e-24 : f32
    %6 = vector.broadcast %cst_5 : f32 to vector<1x256xf32>
    %7 = arith.maximumf %5, %6 : vector<1x256xf32>
    %8 = math.rsqrt %7 : vector<1x256xf32>
    %c0_6 = arith.constant 0 : index
    %c0_7 = arith.constant 0 : index
    %9 = vector.load %arg3[%c0_6, %c0_7] : memref<2x1xf32, #tpu.memory_space<vmem>>, vector<2x1xf32>
    %10 = vector.broadcast %9 : vector<2x1xf32> to vector<2x256xf32>
    %11 = arith.mulf %2, %10 : vector<2x256xf32>
    %12 = vector.broadcast %8 : vector<1x256xf32> to vector<2x256xf32>
    %13 = arith.mulf %11, %12 : vector<2x256xf32>
    %cst_8 = arith.constant 1.000000e+00 : f32
    %14 = vector.broadcast %cst_8 : f32 to vector<2x256xf32>
    %15 = arith.subf %14, %13 : vector<2x256xf32>
    %cst_9 = arith.constant 5.000000e-01 : f32
    %16 = vector.broadcast %cst_9 : f32 to vector<2x256xf32>
    %17 = arith.mulf %15, %16 : vector<2x256xf32>
    %cst_10 = arith.constant 0.000000e+00 : f32
    %cst_11 = arith.constant 1.000000e+00 : f32
    %18 = vector.broadcast %cst_10 : f32 to vector<2x256xf32>
    %19 = arith.maximumf %18, %17 : vector<2x256xf32>
    %20 = vector.broadcast %cst_11 : f32 to vector<2x256xf32>
    %21 = arith.minimumf %20, %19 : vector<2x256xf32>
    %22 = math.sqrt %21 : vector<2x256xf32>
    %cst_12 = arith.constant -0.0012624911 : f32
    %23 = vector.broadcast %cst_12 : f32 to vector<2x256xf32>
    %24 = arith.mulf %23, %22 : vector<2x256xf32>
    %cst_13 = arith.constant 6.670090e-03 : f32
    %25 = vector.broadcast %cst_13 : f32 to vector<2x256xf32>
    %26 = arith.addf %24, %25 : vector<2x256xf32>
    %27 = arith.mulf %26, %22 : vector<2x256xf32>
    %cst_14 = arith.constant -0.0170881264 : f32
    %28 = vector.broadcast %cst_14 : f32 to vector<2x256xf32>
    %29 = arith.addf %27, %28 : vector<2x256xf32>
    %30 = arith.mulf %29, %22 : vector<2x256xf32>
    %cst_15 = arith.constant 0.0308918804 : f32
    %31 = vector.broadcast %cst_15 : f32 to vector<2x256xf32>
    %32 = arith.addf %30, %31 : vector<2x256xf32>
    %33 = arith.mulf %32, %22 : vector<2x256xf32>
    %cst_16 = arith.constant -0.0501743034 : f32
    %34 = vector.broadcast %cst_16 : f32 to vector<2x256xf32>
    %35 = arith.addf %33, %34 : vector<2x256xf32>
    %36 = arith.mulf %35, %22 : vector<2x256xf32>
    %cst_17 = arith.constant 0.0889789909 : f32
    %37 = vector.broadcast %cst_17 : f32 to vector<2x256xf32>
    %38 = arith.addf %36, %37 : vector<2x256xf32>
    %39 = arith.mulf %38, %22 : vector<2x256xf32>
    %cst_18 = arith.constant -0.214598805 : f32
    %40 = vector.broadcast %cst_18 : f32 to vector<2x256xf32>
    %41 = arith.addf %39, %40 : vector<2x256xf32>
    %42 = arith.mulf %41, %22 : vector<2x256xf32>
    %cst_19 = arith.constant 1.57079625 : f32
    %43 = vector.broadcast %cst_19 : f32 to vector<2x256xf32>
    %44 = arith.addf %42, %43 : vector<2x256xf32>
    %cst_20 = arith.constant 1.000000e+00 : f32
    %45 = vector.broadcast %cst_20 : f32 to vector<2x256xf32>
    %46 = arith.subf %45, %22 : vector<2x256xf32>
    %cst_21 = arith.constant 0.000000e+00 : f32
    %47 = vector.broadcast %cst_21 : f32 to vector<2x256xf32>
    %48 = arith.maximumf %46, %47 : vector<2x256xf32>
    %49 = math.sqrt %48 : vector<2x256xf32>
    %50 = arith.mulf %49, %44 : vector<2x256xf32>
    %cst_22 = arith.constant 1.57079637 : f32
    %51 = vector.broadcast %cst_22 : f32 to vector<2x256xf32>
    %52 = arith.subf %51, %50 : vector<2x256xf32>
    %cst_23 = arith.constant 2.000000e+00 : f32
    %53 = vector.broadcast %cst_23 : f32 to vector<2x256xf32>
    %54 = arith.mulf %53, %52 : vector<2x256xf32>
    %55 = arith.mulf %54, %52 : vector<2x256xf32>
    %cst_24 = arith.constant dense<0.000000e+00> : vector<256xf32>
    %56 = vector.multi_reduction <add>, %55, %cst_24 [0] : vector<2x256xf32> to vector<256xf32>
    %57 = vector.shape_cast %56 : vector<256xf32> to vector<1x256xf32>
    %c0_25 = arith.constant 0 : index
    %c0_26 = arith.constant 0 : index
    %58 = vector.load %arg4[%c0_25, %c0_26] : memref<1x256xf32, #tpu.memory_space<vmem>>, vector<1x256xf32>
    tpu.vector_store %arg4[%c0_25, %c0_26], %57 {strides = array<i32>} : memref<1x256xf32, #tpu.memory_space<vmem>>, vector<1x256xf32>,
    return
  }
  func.func @transform_0(%arg0: i32) -> (i32, i32) {
    %c0_i32 = arith.constant 0 : i32
    %c0_i32_0 = arith.constant 0 : i32
    return %arg0, %c0_i32 : i32, i32
  }
  func.func @transform_1(%arg0: i32) -> (i32, i32) {
    %c0_i32 = arith.constant 0 : i32
    %c0_i32_0 = arith.constant 0 : i32
    %c0_i32_1 = arith.constant 0 : i32
    return %c0_i32, %c0_i32_0 : i32, i32
  }
  func.func @transform_2(%arg0: i32) -> (i32, i32) {
    %c0_i32 = arith.constant 0 : i32
    %c0_i32_0 = arith.constant 0 : i32
    %c0_i32_1 = arith.constant 0 : i32
    return %c0_i32, %c0_i32_0 : i32, i32
  }
  func.func @transform_3(%arg0: i32) -> (i32, i32) {
    %c0_i32 = arith.constant 0 : i32
    %c0_i32_0 = arith.constant 0 : i32
    return %c0_i32, %arg0 : i32, i32
  }
}

</mosaic_0001>

<llo_original>
// kernel: prompt_forward.1
$region0: #{prompt_forward.1}
  #allocation0 [shape = 'u32[]', space=smem, size = 0x4, offset = 0x4, fixed_abs, tag = 'smem constant byte address 0x4 - core index']
  #allocation1 [shape = 'u32[144,128]{1,0:T(1,128)}', space=vmem, size = 0x12000, scoped, tag = 'internal scratch']
  %s0 = inlined_call_operand.hbm [shape: f32[256,512], index: 0, kind: input, shape index: {}]
  %s1 = inlined_call_operand.vmem [shape: f32[2,512], index: 1, kind: input, shape index: {}]
  %s2 = inlined_call_operand.vmem [shape: f32[2,1], index: 2, kind: input, shape index: {}]
  %s3 = inlined_call_operand.vmem [shape: f32[1,256], index: 3, kind: output, shape index: {}]
  %s4 = sld [smem:[#allocation0]]
  $region26: #{prompt_forward.1} parent=0
    _
  %s6 = ssub.s32 1, %s4
  %s7 = scalar_select 0, %s6, %s4
  $region1: #{prompt_forward.1} parent=0
    #allocation2 [shape = 'u8[524288]{0}', space=vmem, size = 0x80000, scoped, tag = 'input window, operand 0, single buffered']
    #allocation3 [shape = 's32[1]{0}', space=sflag, size = 0x4, scoped, tag = 'scoped memory for prompt_forward.1']
    %8 = vsyncpa [#allocation3], 0
    // Predicated region
    $region2: #{prompt_forward.1} parent=1 // pred_check
      _
    $region3: #{prompt_forward.1} parent=1 // pred_check_branch
      %10 = sbr.rel (0) target = $region5
    $region4: #{prompt_forward.1} parent=1 // pred_region
      %s12 = ssub.s32 16384, 16384
      %13 = vsyncadd [#allocation3], %s12
      %s14 = sshll.u32 [#allocation2], 4
      %s15 = int_to_ptr.vmem [resolvable:$true] %s14
      %20 = dma.hbm_to_vmem [thread:$0]  %s0, 16384, %s15, [#allocation3], 512, 512, 32
    $region5: #{prompt_forward.1} parent=1 // pred_fallthru
      _
    // Predicated region
    $region6: #{prompt_forward.1} parent=1 // pred_check
      _
    $region7: #{prompt_forward.1} parent=1 // pred_check_branch
      %22 = sbr.rel (0) target = $region9
    $region8: #{prompt_forward.1} parent=1 // pred_region
      _
    $region9: #{prompt_forward.1} parent=1 // pred_fallthru
      _
    // Predicated region
    $region10: #{prompt_forward.1} parent=1 // pred_check
      _
    $region11: #{prompt_forward.1} parent=1 // pred_check_branch
      %24 = sbr.rel (0) target = $region13
    $region12: #{prompt_forward.1} parent=1 // pred_region
      _
    $region13: #{prompt_forward.1} parent=1 // pred_fallthru
      _
    // Predicated region
    $region14: #{prompt_forward.1} parent=1 // pred_check
      _
    $region15: #{prompt_forward.1} parent=1 // pred_check_branch
      %26 = sbr.rel (0) target = $region17
    $region16: #{prompt_forward.1} parent=1 // pred_region
      %27 = dma.done [#allocation3], 16384
    $region17: #{prompt_forward.1} parent=1 // pred_fallthru
      _
    %v28 = vld [vmem:[#allocation2] sm:$0xff]
    %v29 = vld [vmem:[#allocation2 + $0x8] sm:$0xff]
    %v30 = vld [vmem:[#allocation2 + $0x10] sm:$0xff]
    %v31 = vld [vmem:[#allocation2 + $0x18] sm:$0xff]
    %v32 = vld [vmem:[#allocation2 + $0x20] sm:$0xff]
    %v33 = vld [vmem:[#allocation2 + $0x28] sm:$0xff]
    %v34 = vld [vmem:[#allocation2 + $0x30] sm:$0xff]
    %v35 = vld [vmem:[#allocation2 + $0x38] sm:$0xff]
    %v36 = vld [vmem:[#allocation2 + $0x40] sm:$0xff]
    %v37 = vld [vmem:[#allocation2 + $0x48] sm:$0xff]
    %v38 = vld [vmem:[#allocation2 + $0x50] sm:$0xff]
    %v39 = vld [vmem:[#allocation2 + $0x58] sm:$0xff]
    %v40 = vld [vmem:[#allocation2 + $0x60] sm:$0xff]
    %v41 = vld [vmem:[#allocation2 + $0x68] sm:$0xff]
    %v42 = vld [vmem:[#allocation2 + $0x70] sm:$0xff]
    %v43 = vld [vmem:[#allocation2 + $0x78] sm:$0xff]
    %v44 = vld [vmem:[#allocation2 + $0x80] sm:$0xff]
    %v45 = vld [vmem:[#allocation2 + $0x88] sm:$0xff]
    %v46 = vld [vmem:[#allocation2 + $0x90] sm:$0xff]
    %v47 = vld [vmem:[#allocation2 + $0x98] sm:$0xff]
    %v48 = vld [vmem:[#allocation2 + $0xa0] sm:$0xff]
    %v49 = vld [vmem:[#allocation2 + $0xa8] sm:$0xff]
    %v50 = vld [vmem:[#allocation2 + $0xb0] sm:$0xff]
    %v51 = vld [vmem:[#allocation2 + $0xb8] sm:$0xff]
    %v52 = vld [vmem:[#allocation2 + $0xc0] sm:$0xff]
    %v53 = vld [vmem:[#allocation2 + $0xc8] sm:$0xff]
    %v54 = vld [vmem:[#allocation2 + $0xd0] sm:$0xff]
    %v55 = vld [vmem:[#allocation2 + $0xd8] sm:$0xff]
    %v56 = vld [vmem:[#allocation2 + $0xe0] sm:$0xff]
    %v57 = vld [vmem:[#allocation2 + $0xe8] sm:$0xff]
    %v58 = vld [vmem:[#allocation2 + $0xf0] sm:$0xff]
    %v59 = vld [vmem:[#allocation2 + $0xf8] sm:$0xff]
    %v60 = vld [vmem:[#allocation2 + $0x100] sm:$0xff]
    %v61 = vld [vmem:[#allocation2 + $0x108] sm:$0xff]
    %v62 = vld [vmem:[#allocation2 + $0x110] sm:$0xff]
    %v63 = vld [vmem:[#allocation2 + $0x118] sm:$0xff]
    %v64 = vld [vmem:[#allocation2 + $0x120] sm:$0xff]
    %v65 = vld [vmem:[#allocation2 + $0x128] sm:$0xff]
    %v66 = vld [vmem:[#allocation2 + $0x130] sm:$0xff]
    %v67 = vld [vmem:[#allocation2 + $0x138] sm:$0xff]
    %v68 = vld [vmem:[#allocation2 + $0x140] sm:$0xff]
    %v69 = vld [vmem:[#allocation2 + $0x148] sm:$0xff]
    %v70 = vld [vmem:[#allocation2 + $0x150] sm:$0xff]
    %v71 = vld [vmem:[#allocation2 + $0x158] sm:$0xff]
    %v72 = vld [vmem:[#allocation2 + $0x160] sm:$0xff]
    %v73 = vld [vmem:[#allocation2 + $0x168] sm:$0xff]
    %v74 = vld [vmem:[#allocation2 + $0x170] sm:$0xff]
    %v75 = vld [vmem:[#allocation2 + $0x178] sm:$0xff]
    %v76 = vld [vmem:[#allocation2 + $0x180] sm:$0xff]
    %v77 = vld [vmem:[#allocation2 + $0x188] sm:$0xff]
    %v78 = vld [vmem:[#allocation2 + $0x190] sm:$0xff]
    %v79 = vld [vmem:[#allocation2 + $0x198] sm:$0xff]
    %v80 = vld [vmem:[#allocation2 + $0x1a0] sm:$0xff]
    %v81 = vld [vmem:[#allocation2 + $0x1a8] sm:$0xff]
    %v82 = vld [vmem:[#allocation2 + $0x1b0] sm:$0xff]
    %v83 = vld [vmem:[#allocation2 + $0x1b8] sm:$0xff]
    %v84 = vld [vmem:[#allocation2 + $0x1c0] sm:$0xff]
    %v85 = vld [vmem:[#allocation2 + $0x1c8] sm:$0xff]
    %v86 = vld [vmem:[#allocation2 + $0x1d0] sm:$0xff]
    %v87 = vld [vmem:[#allocation2 + $0x1d8] sm:$0xff]
    %v88 = vld [vmem:[#allocation2 + $0x1e0] sm:$0xff]
    %v89 = vld [vmem:[#allocation2 + $0x1e8] sm:$0xff]
    %v90 = vld [vmem:[#allocation2 + $0x1f0] sm:$0xff]
    %v91 = vld [vmem:[#allocation2 + $0x1f8] sm:$0xff]
    %v92 = vld [vmem:[#allocation2 + $0x200] sm:$0xff]
    %v93 = vld [vmem:[#allocation2 + $0x208] sm:$0xff]
    %v94 = vld [vmem:[#allocation2 + $0x210] sm:$0xff]
    %v95 = vld [vmem:[#allocation2 + $0x218] sm:$0xff]
    %v96 = vld [vmem:[#allocation2 + $0x220] sm:$0xff]
    %v97 = vld [vmem:[#allocation2 + $0x228] sm:$0xff]
    %v98 = vld [vmem:[#allocation2 + $0x230] sm:$0xff]
    %v99 = vld [vmem:[#allocation2 + $0x238] sm:$0xff]
    %v100 = vld [vmem:[#allocation2 + $0x240] sm:$0xff]
    %v101 = vld [vmem:[#allocation2 + $0x248] sm:$0xff]
    %v102 = vld [vmem:[#allocation2 + $0x250] sm:$0xff]
    %v103 = vld [vmem:[#allocation2 + $0x258] sm:$0xff]
    %v104 = vld [vmem:[#allocation2 + $0x260] sm:$0xff]
    %v105 = vld [vmem:[#allocation2 + $0x268] sm:$0xff]
    %v106 = vld [vmem:[#allocation2 + $0x270] sm:$0xff]
    %v107 = vld [vmem:[#allocation2 + $0x278] sm:$0xff]
    %v108 = vld [vmem:[#allocation2 + $0x280] sm:$0xff]
    %v109 = vld [vmem:[#allocation2 + $0x288] sm:$0xff]
    %v110 = vld [vmem:[#allocation2 + $0x290] sm:$0xff]
    %v111 = vld [vmem:[#allocation2 + $0x298] sm:$0xff]
    %v112 = vld [vmem:[#allocation2 + $0x2a0] sm:$0xff]
    %v113 = vld [vmem:[#allocation2 + $0x2a8] sm:$0xff]
    %v114 = vld [vmem:[#allocation2 + $0x2b0] sm:$0xff]
    %v115 = vld [vmem:[#allocation2 + $0x2b8] sm:$0xff]
    %v116 = vld [vmem:[#allocation2 + $0x2c0] sm:$0xff]
    %v117 = vld [vmem:[#allocation2 + $0x2c8] sm:$0xff]
    %v118 = vld [vmem:[#allocation2 + $0x2d0] sm:$0xff]
    %v119 = vld [vmem:[#allocation2 + $0x2d8] sm:$0xff]
    %v120 = vld [vmem:[#allocation2 + $0x2e0] sm:$0xff]
    %v121 = vld [vmem:[#allocation2 + $0x2e8] sm:$0xff]
    %v122 = vld [vmem:[#allocation2 + $0x2f0] sm:$0xff]
    %v123 = vld [vmem:[#allocation2 + $0x2f8] sm:$0xff]
    %v124 = vld [vmem:[#allocation2 + $0x300] sm:$0xff]
    %v125 = vld [vmem:[#allocation2 + $0x308] sm:$0xff]
    %v126 = vld [vmem:[#allocation2 + $0x310] sm:$0xff]
    %v127 = vld [vmem:[#allocation2 + $0x318] sm:$0xff]
    %v128 = vld [vmem:[#allocation2 + $0x320] sm:$0xff]
    %v129 = vld [vmem:[#allocation2 + $0x328] sm:$0xff]
    %v130 = vld [vmem:[#allocation2 + $0x330] sm:$0xff]
    %v131 = vld [vmem:[#allocation2 + $0x338] sm:$0xff]
    %v132 = vld [vmem:[#allocation2 + $0x340] sm:$0xff]
    %v133 = vld [vmem:[#allocation2 + $0x348] sm:$0xff]
    %v134 = vld [vmem:[#allocation2 + $0x350] sm:$0xff]
    %v135 = vld [vmem:[#allocation2 + $0x358] sm:$0xff]
    %v136 = vld [vmem:[#allocation2 + $0x360] sm:$0xff]
    %v137 = vld [vmem:[#allocation2 + $0x368] sm:$0xff]
    %v138 = vld [vmem:[#allocation2 + $0x370] sm:$0xff]
    %v139 = vld [vmem:[#allocation2 + $0x378] sm:$0xff]
    %v140 = vld [vmem:[#allocation2 + $0x380] sm:$0xff]
    %v141 = vld [vmem:[#allocation2 + $0x388] sm:$0xff]
    %v142 = vld [vmem:[#allocation2 + $0x390] sm:$0xff]
    %v143 = vld [vmem:[#allocation2 + $0x398] sm:$0xff]
    %v144 = vld [vmem:[#allocation2 + $0x3a0] sm:$0xff]
    %v145 = vld [vmem:[#allocation2 + $0x3a8] sm:$0xff]
    %v146 = vld [vmem:[#allocation2 + $0x3b0] sm:$0xff]
    %v147 = vld [vmem:[#allocation2 + $0x3b8] sm:$0xff]
    %v148 = vld [vmem:[#allocation2 + $0x3c0] sm:$0xff]
    %v149 = vld [vmem:[#allocation2 + $0x3c8] sm:$0xff]
    %v150 = vld [vmem:[#allocation2 + $0x3d0] sm:$0xff]
    %v151 = vld [vmem:[#allocation2 + $0x3d8] sm:$0xff]
    %v152 = vld [vmem:[#allocation2 + $0x3e0] sm:$0xff]
    %v153 = vld [vmem:[#allocation2 + $0x3e8] sm:$0xff]
    %v154 = vld [vmem:[#allocation2 + $0x3f0] sm:$0xff]
    %v155 = vld [vmem:[#allocation2 + $0x3f8] sm:$0xff]
    %v156 = vld [vmem:[%s1] sm:$0xff]
    %v158 = vcombine.high %v156, %v156
    %v160 = vunpack.c.l.s4 1983009808
    %v161 = vunpack.c.0.s8 %v160
    %v162 = vlaneseq
    %v163 = vshrl.u32 %v162, 7
    %v164 = vsub.s32 %v161, %v163
    %v165 = vrot.slane %v156, %v164
    %v167 = vunpack.c.l.s4 1983009808
    %v168 = vunpack.c.0.s8 %v167
    %v169 = vlaneseq
    %v170 = vshrl.u32 %v169, 7
    %v171 = vsub.s32 %v168, %v170
    %v172 = vrot.slane %v158, %v171
    %v173 = vcombine.high %v165, %v165
    %v174 = vcombine.high %v172, %v172
    %179 = vmatprep.subr.mxu0 %v29
    %180 = vmatpush1.xpose.msra.mxu0 %v28
    %181 = vmatprep.subr.mxu0 %v33
    %182 = vmatpush1.xpose.msra.mxu0 %v32
    %183 = vmatprep.subr.mxu0 %v37
    %184 = vmatpush1.xpose.msra.mxu0 %v36
    %185 = vmatprep.subr.mxu0 %v41
    %186 = vmatpush1.xpose.msra.mxu0 %v40
    %187 = vmatprep.subr.mxu0 %v45
    %188 = vmatpush1.xpose.msra.mxu0 %v44
    %189 = vmatprep.subr.mxu0 %v49
    %190 = vmatpush1.xpose.msra.mxu0 %v48
    %191 = vmatprep.subr.mxu0 %v53
    %192 = vmatpush1.xpose.msra.mxu0 %v52
    %193 = vmatprep.subr.mxu0 %v57
    %194 = vmatpush1.xpose.msra.mxu0 %v56
    %195 = vmatprep.subr.mxu0 %v61
    %196 = vmatpush1.xpose.msra.mxu0 %v60
    %197 = vmatprep.subr.mxu0 %v65
    %198 = vmatpush1.xpose.msra.mxu0 %v64
    %199 = vmatprep.subr.mxu0 %v69
    %200 = vmatpush1.xpose.msra.mxu0 %v68
    %201 = vmatprep.subr.mxu0 %v73
    %202 = vmatpush1.xpose.msra.mxu0 %v72
    %203 = vmatprep.subr.mxu0 %v77
    %204 = vmatpush1.xpose.msra.mxu0 %v76
    %205 = vmatprep.subr.mxu0 %v81
    %206 = vmatpush1.xpose.msra.mxu0 %v80
    %207 = vmatprep.subr.mxu0 %v85
    %208 = vmatpush1.xpose.msra.mxu0 %v84
    %209 = vmatprep.subr.mxu0 %v89
    %210 = vmatpush1.xpose.msra.mxu0 %v88
    %211 = vmatprep.subr.mxu0 %v93
    %212 = vmatpush1.xpose.msra.mxu0 %v92
    %213 = vmatprep.subr.mxu0 %v97
    %214 = vmatpush1.xpose.msra.mxu0 %v96
    %215 = vmatprep.subr.mxu0 %v101
    %216 = vmatpush1.xpose.msra.mxu0 %v100
    %217 = vmatprep.subr.mxu0 %v105
    %218 = vmatpush1.xpose.msra.mxu0 %v104
    %219 = vmatprep.subr.mxu0 %v109
    %220 = vmatpush1.xpose.msra.mxu0 %v108
    %221 = vmatprep.subr.mxu0 %v113
    %222 = vmatpush1.xpose.msra.mxu0 %v112
    %223 = vmatprep.subr.mxu0 %v117
    %224 = vmatpush1.xpose.msra.mxu0 %v116
    %225 = vmatprep.subr.mxu0 %v121
    %226 = vmatpush1.xpose.msra.mxu0 %v120
    %227 = vmatprep.subr.mxu0 %v125
    %228 = vmatpush1.xpose.msra.mxu0 %v124
    %229 = vmatprep.subr.mxu0 %v129
    %230 = vmatpush1.xpose.msra.mxu0 %v128
    %231 = vmatprep.subr.mxu0 %v133
    %232 = vmatpush1.xpose.msra.mxu0 %v132
    %233 = vmatprep.subr.mxu0 %v137
    %234 = vmatpush1.xpose.msra.mxu0 %v136
    %235 = vmatprep.subr.mxu0 %v141
    %236 = vmatpush1.xpose.msra.mxu0 %v140
    %237 = vmatprep.subr.mxu0 %v145
    %238 = vmatpush1.xpose.msra.mxu0 %v144
    %239 = vmatprep.subr.mxu0 %v149
    %240 = vmatpush1.xpose.msra.mxu0 %v148
    %241 = vmatprep.subr.mxu0 %v153
    %242 = vmatpush1.xpose.msra.mxu0 %v152
    %243 = vmatprep.mubr.f32.mxu0 %v173
    %244 = vmatmul.mubr.f32.gmra.mrb[0].mxu0 %v165
    %v245 = vpop.f32.mrb[0].mxu0
    %v246 = vadd.f32 0.0, %v245
    %v247 = vpop.f32.mrb[0].mxu0
    %v248 = vadd.f32 0.0, %v247
    %249 = vdwg.mxu0
    %250 = vmatprep.subr.mxu0 %v31
    %251 = vmatpush1.xpose.msra.mxu0 %v30
    %252 = vmatprep.subr.mxu0 %v35
    %253 = vmatpush1.xpose.msra.mxu0 %v34
    %254 = vmatprep.subr.mxu0 %v39
    %255 = vmatpush1.xpose.msra.mxu0 %v38
    %256 = vmatprep.subr.mxu0 %v43
    %257 = vmatpush1.xpose.msra.mxu0 %v42
    %258 = vmatprep.subr.mxu0 %v47
    %259 = vmatpush1.xpose.msra.mxu0 %v46
    %260 = vmatprep.subr.mxu0 %v51
    %261 = vmatpush1.xpose.msra.mxu0 %v50
    %262 = vmatprep.subr.mxu0 %v55
    %263 = vmatpush1.xpose.msra.mxu0 %v54
    %264 = vmatprep.subr.mxu0 %v59
    %265 = vmatpush1.xpose.msra.mxu0 %v58
    %266 = vmatprep.subr.mxu0 %v63
    %267 = vmatpush1.xpose.msra.mxu0 %v62
    %268 = vmatprep.subr.mxu0 %v67
    %269 = vmatpush1.xpose.msra.mxu0 %v66
    %270 = vmatprep.subr.mxu0 %v71
    %271 = vmatpush1.xpose.msra.mxu0 %v70
    %272 = vmatprep.subr.mxu0 %v75
    %273 = vmatpush1.xpose.msra.mxu0 %v74
    %274 = vmatprep.subr.mxu0 %v79
    %275 = vmatpush1.xpose.msra.mxu0 %v78
    %276 = vmatprep.subr.mxu0 %v83
    %277 = vmatpush1.xpose.msra.mxu0 %v82
    %278 = vmatprep.subr.mxu0 %v87
    %279 = vmatpush1.xpose.msra.mxu0 %v86
    %280 = vmatprep.subr.mxu0 %v91
    %281 = vmatpush1.xpose.msra.mxu0 %v90
    %282 = vmatprep.subr.mxu0 %v95
    %283 = vmatpush1.xpose.msra.mxu0 %v94
    %284 = vmatprep.subr.mxu0 %v99
    %285 = vmatpush1.xpose.msra.mxu0 %v98
    %286 = vmatprep.subr.mxu0 %v103
    %287 = vmatpush1.xpose.msra.mxu0 %v102
    %288 = vmatprep.subr.mxu0 %v107
    %289 = vmatpush1.xpose.msra.mxu0 %v106
    %290 = vmatprep.subr.mxu0 %v111
    %291 = vmatpush1.xpose.msra.mxu0 %v110
    %292 = vmatprep.subr.mxu0 %v115
    %293 = vmatpush1.xpose.msra.mxu0 %v114
    %294 = vmatprep.subr.mxu0 %v119
    %295 = vmatpush1.xpose.msra.mxu0 %v118
    %296 = vmatprep.subr.mxu0 %v123
    %297 = vmatpush1.xpose.msra.mxu0 %v122
    %298 = vmatprep.subr.mxu0 %v127
    %299 = vmatpush1.xpose.msra.mxu0 %v126
    %300 = vmatprep.subr.mxu0 %v131
    %301 = vmatpush1.xpose.msra.mxu0 %v130
    %302 = vmatprep.subr.mxu0 %v135
    %303 = vmatpush1.xpose.msra.mxu0 %v134
    %304 = vmatprep.subr.mxu0 %v139
    %305 = vmatpush1.xpose.msra.mxu0 %v138
    %306 = vmatprep.subr.mxu0 %v143
    %307 = vmatpush1.xpose.msra.mxu0 %v142
    %308 = vmatprep.subr.mxu0 %v147
    %309 = vmatpush1.xpose.msra.mxu0 %v146
    %310 = vmatprep.subr.mxu0 %v151
    %311 = vmatpush1.xpose.msra.mxu0 %v150
    %312 = vmatprep.subr.mxu0 %v155
    %313 = vmatpush1.xpose.msra.mxu0 %v154
    %314 = vmatprep.mubr.f32.mxu0 %v174
    %315 = vmatmul.mubr.f32.gmra.mrb[0].mxu0 %v172
    %v316 = vpop.f32.mrb[0].mxu0
    %v317 = vadd.f32 %v246, %v316
    %v318 = vpop.f32.mrb[0].mxu0
    %v319 = vadd.f32 %v248, %v318
    %320 = vdwg.mxu0
    %v321 = vmul.f32 %v28, %v28
    %v322 = vmul.f32 %v29, %v29
    %v323 = vmul.f32 %v30, %v30
    %v324 = vmul.f32 %v31, %v31
    %v325 = vmul.f32 %v32, %v32
    %v326 = vmul.f32 %v33, %v33
    %v327 = vmul.f32 %v34, %v34
    %v328 = vmul.f32 %v35, %v35
    %v329 = vmul.f32 %v36, %v36
    %v330 = vmul.f32 %v37, %v37
    %v331 = vmul.f32 %v38, %v38
    %v332 = vmul.f32 %v39, %v39
    %v333 = vmul.f32 %v40, %v40
    %v334 = vmul.f32 %v41, %v41
    %v335 = vmul.f32 %v42, %v42
    %v336 = vmul.f32 %v43, %v43
    %v337 = vmul.f32 %v44, %v44
    %v338 = vmul.f32 %v45, %v45
    %v339 = vmul.f32 %v46, %v46
    %v340 = vmul.f32 %v47, %v47
    %v341 = vmul.f32 %v48, %v48
    %v342 = vmul.f32 %v49, %v49
    %v343 = vmul.f32 %v50, %v50
    %v344 = vmul.f32 %v51, %v51
    %v345 = vmul.f32 %v52, %v52
    %v346 = vmul.f32 %v53, %v53
    %v347 = vmul.f32 %v54, %v54
    %v348 = vmul.f32 %v55, %v55
    %v349 = vmul.f32 %v56, %v56
    %v350 = vmul.f32 %v57, %v57
    %v351 = vmul.f32 %v58, %v58
    %v352 = vmul.f32 %v59, %v59
    %v353 = vmul.f32 %v60, %v60
    %v354 = vmul.f32 %v61, %v61
    %v355 = vmul.f32 %v62, %v62
    %v356 = vmul.f32 %v63, %v63
    %v357 = vmul.f32 %v64, %v64
    %v358 = vmul.f32 %v65, %v65
    %v359 = vmul.f32 %v66, %v66
    %v360 = vmul.f32 %v67, %v67
    %v361 = vmul.f32 %v68, %v68
    %v362 = vmul.f32 %v69, %v69
    %v363 = vmul.f32 %v70, %v70
    %v364 = vmul.f32 %v71, %v71
    %v365 = vmul.f32 %v72, %v72
    %v366 = vmul.f32 %v73, %v73
    %v367 = vmul.f32 %v74, %v74
    %v368 = vmul.f32 %v75, %v75
    %v369 = vmul.f32 %v76, %v76
    %v370 = vmul.f32 %v77, %v77
    %v371 = vmul.f32 %v78, %v78
    %v372 = vmul.f32 %v79, %v79
    %v373 = vmul.f32 %v80, %v80
    %v374 = vmul.f32 %v81, %v81
    %v375 = vmul.f32 %v82, %v82
    %v376 = vmul.f32 %v83, %v83
    %v377 = vmul.f32 %v84, %v84
    %v378 = vmul.f32 %v85, %v85
    %v379 = vmul.f32 %v86, %v86
    %v380 = vmul.f32 %v87, %v87
    %v381 = vmul.f32 %v88, %v88
    %v382 = vmul.f32 %v89, %v89
    %v383 = vmul.f32 %v90, %v90
    %v384 = vmul.f32 %v91, %v91
    %v385 = vmul.f32 %v92, %v92
    %v386 = vmul.f32 %v93, %v93
    %v387 = vmul.f32 %v94, %v94
    %v388 = vmul.f32 %v95, %v95
    %v389 = vmul.f32 %v96, %v96
    %v390 = vmul.f32 %v97, %v97
    %v391 = vmul.f32 %v98, %v98
    %v392 = vmul.f32 %v99, %v99
    %v393 = vmul.f32 %v100, %v100
    %v394 = vmul.f32 %v101, %v101
    %v395 = vmul.f32 %v102, %v102
    %v396 = vmul.f32 %v103, %v103
    %v397 = vmul.f32 %v104, %v104
    %v398 = vmul.f32 %v105, %v105
    %v399 = vmul.f32 %v106, %v106
    %v400 = vmul.f32 %v107, %v107
    %v401 = vmul.f32 %v108, %v108
    %v402 = vmul.f32 %v109, %v109
    %v403 = vmul.f32 %v110, %v110
    %v404 = vmul.f32 %v111, %v111
    %v405 = vmul.f32 %v112, %v112
    %v406 = vmul.f32 %v113, %v113
    %v407 = vmul.f32 %v114, %v114
    %v408 = vmul.f32 %v115, %v115
    %v409 = vmul.f32 %v116, %v116
    %v410 = vmul.f32 %v117, %v117
    %v411 = vmul.f32 %v118, %v118
    %v412 = vmul.f32 %v119, %v119
    %v413 = vmul.f32 %v120, %v120
    %v414 = vmul.f32 %v121, %v121
    %v415 = vmul.f32 %v122, %v122
    %v416 = vmul.f32 %v123, %v123
    %v417 = vmul.f32 %v124, %v124
    %v418 = vmul.f32 %v125, %v125
    %v419 = vmul.f32 %v126, %v126
    %v420 = vmul.f32 %v127, %v127
    %v421 = vmul.f32 %v128, %v128
    %v422 = vmul.f32 %v129, %v129
    %v423 = vmul.f32 %v130, %v130
    %v424 = vmul.f32 %v131, %v131
    %v425 = vmul.f32 %v132, %v132
    %v426 = vmul.f32 %v133, %v133
    %v427 = vmul.f32 %v134, %v134
    %v428 = vmul.f32 %v135, %v135
    %v429 = vmul.f32 %v136, %v136
    %v430 = vmul.f32 %v137, %v137
    %v431 = vmul.f32 %v138, %v138
    %v432 = vmul.f32 %v139, %v139
    %v433 = vmul.f32 %v140, %v140
    %v434 = vmul.f32 %v141, %v141
    %v435 = vmul.f32 %v142, %v142
    %v436 = vmul.f32 %v143, %v143
    %v437 = vmul.f32 %v144, %v144
    %v438 = vmul.f32 %v145, %v145
    %v439 = vmul.f32 %v146, %v146
    %v440 = vmul.f32 %v147, %v147
    %v441 = vmul.f32 %v148, %v148
    %v442 = vmul.f32 %v149, %v149
    %v443 = vmul.f32 %v150, %v150
    %v444 = vmul.f32 %v151, %v151
    %v445 = vmul.f32 %v152, %v152
    %v446 = vmul.f32 %v153, %v153
    %v447 = vmul.f32 %v154, %v154
    %v448 = vmul.f32 %v155, %v155
    %449 = vmatprep.subr.mxu0 %v322
    %450 = vmatpush1.xpose.msra.mxu0 %v321
    %451 = vmatprep.subr.mxu0 %v326
    %452 = vmatpush1.xpose.msra.mxu0 %v325
    %453 = vmatprep.subr.mxu0 %v330
    %454 = vmatpush1.xpose.msra.mxu0 %v329
    %455 = vmatprep.subr.mxu0 %v334
    %456 = vmatpush1.xpose.msra.mxu0 %v333
    %457 = vmatprep.subr.mxu0 %v338
    %458 = vmatpush1.xpose.msra.mxu0 %v337
    %459 = vmatprep.subr.mxu0 %v342
    %460 = vmatpush1.xpose.msra.mxu0 %v341
    %461 = vmatprep.subr.mxu0 %v346
    %462 = vmatpush1.xpose.msra.mxu0 %v345
    %463 = vmatprep.subr.mxu0 %v350
    %464 = vmatpush1.xpose.msra.mxu0 %v349
    %465 = vmatprep.subr.mxu0 %v354
    %466 = vmatpush1.xpose.msra.mxu0 %v353
    %467 = vmatprep.subr.mxu0 %v358
    %468 = vmatpush1.xpose.msra.mxu0 %v357
    %469 = vmatprep.subr.mxu0 %v362
    %470 = vmatpush1.xpose.msra.mxu0 %v361
    %471 = vmatprep.subr.mxu0 %v366
    %472 = vmatpush1.xpose.msra.mxu0 %v365
    %473 = vmatprep.subr.mxu0 %v370
    %474 = vmatpush1.xpose.msra.mxu0 %v369
    %475 = vmatprep.subr.mxu0 %v374
    %476 = vmatpush1.xpose.msra.mxu0 %v373
    %477 = vmatprep.subr.mxu0 %v378
    %478 = vmatpush1.xpose.msra.mxu0 %v377
    %479 = vmatprep.subr.mxu0 %v382
    %480 = vmatpush1.xpose.msra.mxu0 %v381
    %481 = vmatprep.subr.mxu0 %v386
    %482 = vmatpush1.xpose.msra.mxu0 %v385
    %483 = vmatprep.subr.mxu0 %v390
    %484 = vmatpush1.xpose.msra.mxu0 %v389
    %485 = vmatprep.subr.mxu0 %v394
    %486 = vmatpush1.xpose.msra.mxu0 %v393
    %487 = vmatprep.subr.mxu0 %v398
    %488 = vmatpush1.xpose.msra.mxu0 %v397
    %489 = vmatprep.subr.mxu0 %v402
    %490 = vmatpush1.xpose.msra.mxu0 %v401
    %491 = vmatprep.subr.mxu0 %v406
    %492 = vmatpush1.xpose.msra.mxu0 %v405
    %493 = vmatprep.subr.mxu0 %v410
    %494 = vmatpush1.xpose.msra.mxu0 %v409
    %495 = vmatprep.subr.mxu0 %v414
    %496 = vmatpush1.xpose.msra.mxu0 %v413
    %497 = vmatprep.subr.mxu0 %v418
    %498 = vmatpush1.xpose.msra.mxu0 %v417
    %499 = vmatprep.subr.mxu0 %v422
    %500 = vmatpush1.xpose.msra.mxu0 %v421
    %501 = vmatprep.subr.mxu0 %v426
    %502 = vmatpush1.xpose.msra.mxu0 %v425
    %503 = vmatprep.subr.mxu0 %v430
    %504 = vmatpush1.xpose.msra.mxu0 %v429
    %505 = vmatprep.subr.mxu0 %v434
    %506 = vmatpush1.xpose.msra.mxu0 %v433
    %507 = vmatprep.subr.mxu0 %v438
    %508 = vmatpush1.xpose.msra.mxu0 %v437
    %509 = vmatprep.subr.mxu0 %v442
    %510 = vmatpush1.xpose.msra.mxu0 %v441
    %511 = vmatprep.subr.mxu0 %v446
    %512 = vmatpush1.xpose.msra.mxu0 %v445
    %513 = vmatprep.mubr.f32.mxu0 1.0
    %514 = vmatmul.mubr.f32.gmra.mrb[0].mxu0 1.0
    %v515 = vpop.f32.mrb[0].mxu0
    %v516 = vadd.f32 0.0, %v515
    %v517 = vpop.f32.mrb[0].mxu0
    %v518 = vadd.f32 0.0, %v517
    %519 = vdwg.mxu0
    %520 = vmatprep.subr.mxu0 %v324
    %521 = vmatpush1.xpose.msra.mxu0 %v323
    %522 = vmatprep.subr.mxu0 %v328
    %523 = vmatpush1.xpose.msra.mxu0 %v327
    %524 = vmatprep.subr.mxu0 %v332
    %525 = vmatpush1.xpose.msra.mxu0 %v331
    %526 = vmatprep.subr.mxu0 %v336
    %527 = vmatpush1.xpose.msra.mxu0 %v335
    %528 = vmatprep.subr.mxu0 %v340
    %529 = vmatpush1.xpose.msra.mxu0 %v339
    %530 = vmatprep.subr.mxu0 %v344
    %531 = vmatpush1.xpose.msra.mxu0 %v343
    %532 = vmatprep.subr.mxu0 %v348
    %533 = vmatpush1.xpose.msra.mxu0 %v347
    %534 = vmatprep.subr.mxu0 %v352
    %535 = vmatpush1.xpose.msra.mxu0 %v351
    %536 = vmatprep.subr.mxu0 %v356
    %537 = vmatpush1.xpose.msra.mxu0 %v355
    %538 = vmatprep.subr.mxu0 %v360
    %539 = vmatpush1.xpose.msra.mxu0 %v359
    %540 = vmatprep.subr.mxu0 %v364
    %541 = vmatpush1.xpose.msra.mxu0 %v363
    %542 = vmatprep.subr.mxu0 %v368
    %543 = vmatpush1.xpose.msra.mxu0 %v367
    %544 = vmatprep.subr.mxu0 %v372
    %545 = vmatpush1.xpose.msra.mxu0 %v371
    %546 = vmatprep.subr.mxu0 %v376
    %547 = vmatpush1.xpose.msra.mxu0 %v375
    %548 = vmatprep.subr.mxu0 %v380
    %549 = vmatpush1.xpose.msra.mxu0 %v379
    %550 = vmatprep.subr.mxu0 %v384
    %551 = vmatpush1.xpose.msra.mxu0 %v383
    %552 = vmatprep.subr.mxu0 %v388
    %553 = vmatpush1.xpose.msra.mxu0 %v387
    %554 = vmatprep.subr.mxu0 %v392
    %555 = vmatpush1.xpose.msra.mxu0 %v391
    %556 = vmatprep.subr.mxu0 %v396
    %557 = vmatpush1.xpose.msra.mxu0 %v395
    %558 = vmatprep.subr.mxu0 %v400
    %559 = vmatpush1.xpose.msra.mxu0 %v399
    %560 = vmatprep.subr.mxu0 %v404
    %561 = vmatpush1.xpose.msra.mxu0 %v403
    %562 = vmatprep.subr.mxu0 %v408
    %563 = vmatpush1.xpose.msra.mxu0 %v407
    %564 = vmatprep.subr.mxu0 %v412
    %565 = vmatpush1.xpose.msra.mxu0 %v411
    %566 = vmatprep.subr.mxu0 %v416
    %567 = vmatpush1.xpose.msra.mxu0 %v415
    %568 = vmatprep.subr.mxu0 %v420
    %569 = vmatpush1.xpose.msra.mxu0 %v419
    %570 = vmatprep.subr.mxu0 %v424
    %571 = vmatpush1.xpose.msra.mxu0 %v423
    %572 = vmatprep.subr.mxu0 %v428
    %573 = vmatpush1.xpose.msra.mxu0 %v427
    %574 = vmatprep.subr.mxu0 %v432
    %575 = vmatpush1.xpose.msra.mxu0 %v431
    %576 = vmatprep.subr.mxu0 %v436
    %577 = vmatpush1.xpose.msra.mxu0 %v435
    %578 = vmatprep.subr.mxu0 %v440
    %579 = vmatpush1.xpose.msra.mxu0 %v439
    %580 = vmatprep.subr.mxu0 %v444
    %581 = vmatpush1.xpose.msra.mxu0 %v443
    %582 = vmatprep.subr.mxu0 %v448
    %583 = vmatpush1.xpose.msra.mxu0 %v447
    %584 = vmatprep.mubr.f32.mxu0 1.0
    %585 = vmatmul.mubr.f32.gmra.mrb[0].mxu0 1.0
    %v586 = vpop.f32.mrb[0].mxu0
    %v587 = vadd.f32 %v516, %v586
    %v588 = vpop.f32.mrb[0].mxu0
    %v589 = vadd.f32 %v518, %v588
    %590 = vdwg.mxu0
    %v591 = vmax.f32 %v587, 1e-24
    %v592 = vmax.f32 %v589, 1e-24
    %v593 = vrsqrt.pop %v591
    %v594 = vrsqrt.pop %v592
    %v595 = vld [vmem:[%s2] sm:$0x3]
    %597 = vset.pattern.permute.xlu0 0
    %598 = vperm.xlu0 %597, %v595
    %v599 = vpop.permute.xlu0 %598
    %v601 = vmul.f32 %v317, %v599
    %v602 = vmul.f32 %v319, %v599
    %v603 = vlaneseq
    %v604 = vshrl.u32 %v603, 7
    %v605 = vsub.s32 0, %v604
    %v606 = vrot.slane %v593, %v605
    %v607 = vlaneseq
    %v608 = vshrl.u32 %v607, 7
    %v609 = vsub.s32 0, %v608
    %v610 = vrot.slane %v594, %v609
    %v611 = vmul.f32 %v601, %v606
    %v612 = vmul.f32 %v602, %v610
    %v613 = vsub.f32 1.0, %v611
    %v614 = vsub.f32 1.0, %v612
    %v615 = vmul.f32 %v613, 0.5
    %v616 = vmul.f32 %v614, 0.5
    %v617 = vmax.f32 %v615, 0.0
    %v618 = vmax.f32 %v616, 0.0
    %v619 = vmin.f32 %v617, 1.0
    %v620 = vmin.f32 %v618, 1.0
    %v621 = vrsqrt.pop %v619
    %v622 = vmul.f32 %v619, %v621
    %vm623 = vcmp.eq.f32.partialorder %v619, inf
    %v624 = vsel %vm623, %v619, %v622
    %vm625 = vcmp.eq.f32.partialorder %v619, 0.0
    %v626 = vand.u32 %v619, 2147483648
    %v627 = vsel %vm625, %v626, %v624
    %v628 = vrsqrt.pop %v620
    %v629 = vmul.f32 %v620, %v628
    %vm630 = vcmp.eq.f32.partialorder %v620, inf
    %v631 = vsel %vm630, %v620, %v629
    %vm632 = vcmp.eq.f32.partialorder %v620, 0.0
    %v633 = vand.u32 %v620, 2147483648
    %v634 = vsel %vm632, %v633, %v631
    %v635 = vmul.f32 %v627, -0.0012624911
    %v636 = vmul.f32 %v634, -0.0012624911
    %v637 = vadd.f32 %v635, 0.00667009
    %v638 = vadd.f32 %v636, 0.00667009
    %v639 = vmul.f32 %v637, %v627
    %v640 = vmul.f32 %v638, %v634
    %v641 = vadd.f32 %v639, -0.017088126
    %v642 = vadd.f32 %v640, -0.017088126
    %v643 = vmul.f32 %v641, %v627
    %v644 = vmul.f32 %v642, %v634
    %v645 = vadd.f32 %v643, 0.03089188
    %v646 = vadd.f32 %v644, 0.03089188
    %v647 = vmul.f32 %v645, %v627
    %v648 = vmul.f32 %v646, %v634
    %v649 = vadd.f32 %v647, -0.050174303
    %v650 = vadd.f32 %v648, -0.050174303
    %v651 = vmul.f32 %v649, %v627
    %v652 = vmul.f32 %v650, %v634
    %v653 = vadd.f32 %v651, 0.08897899
    %v654 = vadd.f32 %v652, 0.08897899
    %v655 = vmul.f32 %v653, %v627
    %v656 = vmul.f32 %v654, %v634
    %v657 = vadd.f32 %v655, -0.2145988
    %v658 = vadd.f32 %v656, -0.2145988
    %v659 = vmul.f32 %v657, %v627
    %v660 = vmul.f32 %v658, %v634
    %v661 = vadd.f32 %v659, 1.5707963
    %v662 = vadd.f32 %v660, 1.5707963
    %v663 = vsub.f32 1.0, %v627
    %v664 = vsub.f32 1.0, %v634
    %v665 = vmax.f32 %v663, 0.0
    %v666 = vmax.f32 %v664, 0.0
    %v667 = vrsqrt.pop %v665
    %v668 = vmul.f32 %v665, %v667
    %vm669 = vcmp.eq.f32.partialorder %v665, inf
    %v670 = vsel %vm669, %v665, %v668
    %vm671 = vcmp.eq.f32.partialorder %v665, 0.0
    %v672 = vand.u32 %v665, 2147483648
    %v673 = vsel %vm671, %v672, %v670
    %v674 = vrsqrt.pop %v666
    %v675 = vmul.f32 %v666, %v674
    %vm676 = vcmp.eq.f32.partialorder %v666, inf
    %v677 = vsel %vm676, %v666, %v675
    %vm678 = vcmp.eq.f32.partialorder %v666, 0.0
    %v679 = vand.u32 %v666, 2147483648
    %v680 = vsel %vm678, %v679, %v677
    %v681 = vmul.f32 %v673, %v661
    %v682 = vmul.f32 %v680, %v662
    %v683 = vsub.f32 1.5707964, %v681
    %v684 = vsub.f32 1.5707964, %v682
    %v685 = vmul.f32 %v683, 2.0
    %v686 = vmul.f32 %v684, 2.0
    %v687 = vmul.f32 %v685, %v683
    %v688 = vmul.f32 %v686, %v684
    %vm689 = vcmask 1041408
    %v690 = vsel %vm689, %v687, 0.0
    %v691 = vrot.slane %v690, 4
    %v692 = vadd.f32 %v690, %v691
    %v693 = vrot.slane %v692, 2
    %v694 = vadd.f32 %v692, %v693
    %v695 = vrot.slane %v694, 1
    %v696 = vadd.f32 %v694, %v695
    %v697 = vsel %vm689, %v688, 0.0
    %v698 = vrot.slane %v697, 4
    %v699 = vadd.f32 %v697, %v698
    %v700 = vrot.slane %v699, 2
    %v701 = vadd.f32 %v699, %v700
    %v702 = vrot.slane %v701, 1
    %v703 = vadd.f32 %v701, %v702
    %v706 = vcombine.low %v696, %v703
    %v708 = vunpack.c.l.s4 1966171168
    %v709 = vunpack.c.0.s8 %v708
    %v710 = vlaneseq
    %v711 = vshrl.u32 %v710, 7
    %v712 = vsub.s32 %v709, %v711
    %v713 = vrot.slane %v706, %v712
    %v715 = vunpack.c.l.s4 1966171168
    %v716 = vunpack.c.0.s8 %v715
    %v717 = vlaneseq
    %v718 = vshrl.u32 %v717, 7
    %v719 = vsub.s32 %v716, %v718
    %v720 = vrot.slane %v713, %v719
    %v722 = vlaneseq
    %vm723 = vcmp.ge.s32.totalorder %v722, 0
    %vm724 = vcmp.lt.s32.totalorder %v722, 256
    %vm725 = vmand %vm723, %vm724
    %726 = vst.msk [vmem:[%s3] sm:$0x3] %vm725, %v720
    // Predicated region
    $region18: #{prompt_forward.1} parent=1 // pred_check
      _
    $region19: #{prompt_forward.1} parent=1 // pred_check_branch
      %728 = sbr.rel (0) target = $region21
    $region20: #{prompt_forward.1} parent=1 // pred_region
      _
    $region21: #{prompt_forward.1} parent=1 // pred_fallthru
      _
    // Predicated region
    $region22: #{prompt_forward.1} parent=1 // pred_check
      _
    $region23: #{prompt_forward.1} parent=1 // pred_check_branch
      %730 = sbr.rel (0) target = $region25
    $region24: #{prompt_forward.1} parent=1 // pred_region
      _
    $region25: #{prompt_forward.1} parent=1 // pred_fallthru
      _
    %731 = vsyncpa [#allocation3], 1

</llo_original>
